<compile_context>
chip_gen: v5e
topology: v5e:2x2
jax: 0.10.0
libtpu: 0.0.40
codegen_flags: <defaults>
</compile_context>

<pallas_src>
import jax
import jax.numpy as jnp
from jax.experimental import pallas as pl
from jax.experimental.pallas import tpu as pltpu


def count_fusion_kernel(x_ref, y_ref, wx_ref, wy_ref, bx_ref, by_ref, o_ref):
    # Two D-wide MXU matmuls with f32 accumulation; cheap VPU epilogue.
    x1 = jnp.dot(x_ref[...], wx_ref[...],
                 preferred_element_type=jnp.float32) + bx_ref[...]
    y1 = jnp.dot(y_ref[...], wy_ref[...],
                 preferred_element_type=jnp.float32) + by_ref[...]
    s = x1 + y1
    d = x1 - y1
    o_ref[...] = (jnp.maximum(s, 0.0) - d * d).astype(o_ref.dtype)


def count_fusion(x, y, wx, bx, wy, by, *, tb=1024, min_grid_steps=8):
    """x: [B, dim_x], y: [B, dim_y], wx: [dim_x, D], bx: [D], wy: [dim_y, D], by: [D].

    Weights are carried pre-transposed ([in, out]) relative to PyTorch's
    nn.Linear storage ([out, in]).
    """
    B, dim_x = x.shape
    dim_y = y.shape[1]
    D = wx.shape[1]

    def rup8(n):
        return -(-n // 8) * 8

    # --- batch tile selection -------------------------------------------------
    # Big batches: use the full tb (plenty of grid steps already).
    # Moderate batches: shrink the tile so the parallel axis keeps at least
    # `min_grid_steps` steps (v7x has 2 TensorCores splitting the grid).
    # Tiny batches: single (possibly ragged) tile.
    if B > tb:
        tb_eff = tb
    elif B >= min_grid_steps * 8:
        tb_eff = rup8(pl.cdiv(B, min_grid_steps))
    else:
        tb_eff = B if B <= 8 else rup8(B)

    grid = (pl.cdiv(B, tb_eff),)

    # Biases as [1, D] rows (broadcast inside the kernel); trivially cheap,
    # nothing else is (re)built per call.
    bx2 = bx.reshape(1, D)
    by2 = by.reshape(1, D)

    # Advisory cost so XLA can overlap this (tiny) kernel with neighbors.
    flops = 2 * B * (dim_x + dim_y) * D
    bytes_accessed = 4 * (B * (dim_x + dim_y)          # activations in
                          + (dim_x + dim_y) * D + 2 * D  # params
                          + B * D)                       # output

    return pl.pallas_call(
        count_fusion_kernel,
        out_shape=jax.ShapeDtypeStruct((B, D), jnp.float32),
        grid=grid,
        in_specs=[
            pl.BlockSpec((tb_eff, dim_x), lambda i: (i, 0)),   # x: tiled rows
            pl.BlockSpec((tb_eff, dim_y), lambda i: (i, 0)),   # y: tiled rows
            pl.BlockSpec((dim_x, D), lambda i: (0, 0)),        # Wx: resident
            pl.BlockSpec((dim_y, D), lambda i: (0, 0)),        # Wy: resident
            pl.BlockSpec((1, D), lambda i: (0, 0)),            # bx: resident
            pl.BlockSpec((1, D), lambda i: (0, 0)),            # by: resident
        ],
        out_specs=pl.BlockSpec((tb_eff, D), lambda i: (i, 0)),
        compiler_params=pltpu.CompilerParams(
            dimension_semantics=("parallel",)),
        cost_estimate=pl.CostEstimate(
            flops=flops, transcendentals=0, bytes_accessed=bytes_accessed),
    )(x, y, wx, wy, bx2, by2)


def count_fusion_ref(x, y, wx, bx, wy, by):
    x1 = x @ wx + bx
    y1 = y @ wy + by
    item1 = jnp.maximum(x1 + y1, 0.0)
    item2 = (x1 - y1) ** 2
    return item1 - item2


if __name__ == "__main__":
    B, dim_x, dim_y, output_dim = 8, 32, 48, 128

    key = jax.random.PRNGKey(0)
    kx, ky, kwx, kbx, kwy, kby = jax.random.split(key, 6)

    x = jax.random.normal(kx, (B, dim_x), dtype=jnp.float32)
    y = jax.random.normal(ky, (B, dim_y), dtype=jnp.float32)

    # Deterministic "Linear" params (PyTorch stores weight as [out, in]; we keep
    # the already-transposed [in, out] layout for the kernel).
    wx = jax.random.normal(kwx, (dim_x, output_dim), dtype=jnp.float32) * 0.05
    bx = jax.random.normal(kbx, (output_dim,), dtype=jnp.float32) * 0.05
    wy = jax.random.normal(kwy, (dim_y, output_dim), dtype=jnp.float32) * 0.05
    by = jax.random.normal(kby, (output_dim,), dtype=jnp.float32) * 0.05

    # Small case: single full-array tile.
    out = jax.block_until_ready(count_fusion(x, y, wx, bx, wy, by))
    ref = count_fusion_ref(x, y, wx, bx, wy, by)
    assert out.shape == (B, output_dim)
    assert jnp.allclose(out, ref, atol=1e-4, rtol=1e-4), "mismatch vs reference (small batch)"

    # Larger, non-multiple-of-tile batch: exercises the multi-step parallel grid
    # and the ragged (padded-read / dropped-write) final block.
    B2 = 272
    kx2, ky2 = jax.random.split(jax.random.PRNGKey(1), 2)
    x2 = jax.random.normal(kx2, (B2, dim_x), dtype=jnp.float32)
    y2 = jax.random.normal(ky2, (B2, dim_y), dtype=jnp.float32)
    out2 = jax.block_until_ready(count_fusion(x2, y2, wx, bx, wy, by))
    ref2 = count_fusion_ref(x2, y2, wx, bx, wy, by)
    assert out2.shape == (B2, output_dim)
    assert jnp.allclose(out2, ref2, atol=1e-4, rtol=1e-4), "mismatch vs reference (tiled batch)"

    # Tiny, non-multiple-of-8 batch: single ragged tile equal to full array dims.
    B3 = 5
    kx3, ky3 = jax.random.split(jax.random.PRNGKey(2), 2)
    x3 = jax.random.normal(kx3, (B3, dim_x), dtype=jnp.float32)
    y3 = jax.random.normal(ky3, (B3, dim_y), dtype=jnp.float32)
    out3 = jax.block_until_ready(count_fusion(x3, y3, wx, bx, wy, by))
    ref3 = count_fusion_ref(x3, y3, wx, bx, wy, by)
    assert out3.shape == (B3, output_dim)
    assert jnp.allclose(out3, ref3, atol=1e-4, rtol=1e-4), "mismatch vs reference (tiny batch)"

    print("KERNEL_OK")
</pallas_src>

<mosaic_0001>
module attributes {stable_mosaic.version = 11 : i64} {
  func.func @count_fusion_kernel(%arg0: i32, %arg1: memref<8x32xf32, #tpu.memory_space<vmem>>, %arg2: memref<8x48xf32, #tpu.memory_space<vmem>>, %arg3: memref<32x128xf32, #tpu.memory_space<vmem>>, %arg4: memref<48x128xf32, #tpu.memory_space<vmem>>, %arg5: memref<1x128xf32, #tpu.memory_space<vmem>>, %arg6: memref<1x128xf32, #tpu.memory_space<vmem>>, %arg7: memref<8x128xf32, #tpu.memory_space<vmem>>) attributes {dimension_semantics = [#tpu.dimension_semantics<parallel>], iteration_bounds = array<i64: 1>, scalar_prefetch = 0 : i64, scratch_operands = 0 : i64, tpu.core_type = #tpu.core_type<tc>, window_params = [{transform_indices = @transform_0, window_bounds = array<i64: 8, 32>}, {transform_indices = @transform_1, window_bounds = array<i64: 8, 48>}, {pipeline_mode = #tpu.pipeline_mode<synchronous>, transform_indices = @transform_2, window_bounds = array<i64: 32, 128>}, {pipeline_mode = #tpu.pipeline_mode<synchronous>, transform_indices = @transform_3, window_bounds = array<i64: 48, 128>}, {pipeline_mode = #tpu.pipeline_mode<synchronous>, transform_indices = @transform_4, window_bounds = array<i64: 1, 128>}, {pipeline_mode = #tpu.pipeline_mode<synchronous>, transform_indices = @transform_5, window_bounds = array<i64: 1, 128>}, {transform_indices = @transform_6, window_bounds = array<i64: 8, 128>}]} {
    %c0 = arith.constant 0 : index
    %c0_0 = arith.constant 0 : index
    %0 = vector.load %arg1[%c0, %c0_0] : memref<8x32xf32, #tpu.memory_space<vmem>>, vector<8x32xf32>
    %c0_1 = arith.constant 0 : index
    %c0_2 = arith.constant 0 : index
    %1 = vector.load %arg3[%c0_1, %c0_2] : memref<32x128xf32, #tpu.memory_space<vmem>>, vector<32x128xf32>
    %cst = arith.constant dense<0.000000e+00> : vector<8x128xf32>
    %2 = tpu.matmul %0, %1, %cst {dimension_numbers = #tpu.dot_dimension_numbers<[1], [0], [0], [1], [0, 0, 1, 1], [], []>} : vector<8x32xf32>, vector<32x128xf32>, vector<8x128xf32> -> vector<8x128xf32>
    %c0_3 = arith.constant 0 : index
    %c0_4 = arith.constant 0 : index
    %3 = vector.load %arg5[%c0_3, %c0_4] : memref<1x128xf32, #tpu.memory_space<vmem>>, vector<1x128xf32>
    %4 = vector.broadcast %3 : vector<1x128xf32> to vector<8x128xf32>
    %5 = arith.addf %2, %4 : vector<8x128xf32>
    %c0_5 = arith.constant 0 : index
    %c0_6 = arith.constant 0 : index
    %6 = vector.load %arg2[%c0_5, %c0_6] : memref<8x48xf32, #tpu.memory_space<vmem>>, vector<8x48xf32>
    %c0_7 = arith.constant 0 : index
    %c0_8 = arith.constant 0 : index
    %7 = vector.load %arg4[%c0_7, %c0_8] : memref<48x128xf32, #tpu.memory_space<vmem>>, vector<48x128xf32>
    %cst_9 = arith.constant dense<0.000000e+00> : vector<8x128xf32>
    %8 = tpu.matmul %6, %7, %cst_9 {dimension_numbers = #tpu.dot_dimension_numbers<[1], [0], [0], [1], [0, 0, 1, 1], [], []>} : vector<8x48xf32>, vector<48x128xf32>, vector<8x128xf32> -> vector<8x128xf32>
    %c0_10 = arith.constant 0 : index
    %c0_11 = arith.constant 0 : index
    %9 = vector.load %arg6[%c0_10, %c0_11] : memref<1x128xf32, #tpu.memory_space<vmem>>, vector<1x128xf32>
    %10 = vector.broadcast %9 : vector<1x128xf32> to vector<8x128xf32>
    %11 = arith.addf %8, %10 : vector<8x128xf32>
    %12 = arith.addf %5, %11 : vector<8x128xf32>
    %13 = arith.subf %5, %11 : vector<8x128xf32>
    %cst_12 = arith.constant 0.000000e+00 : f32
    %14 = vector.broadcast %cst_12 : f32 to vector<8x128xf32>
    %15 = arith.maximumf %12, %14 : vector<8x128xf32>
    %16 = arith.mulf %13, %13 : vector<8x128xf32>
    %17 = arith.subf %15, %16 : vector<8x128xf32>
    %c0_13 = arith.constant 0 : index
    %c0_14 = arith.constant 0 : index
    %18 = vector.load %arg7[%c0_13, %c0_14] : memref<8x128xf32, #tpu.memory_space<vmem>>, vector<8x128xf32>
    tpu.vector_store %arg7[%c0_13, %c0_14], %17 {strides = array<i32>} : memref<8x128xf32, #tpu.memory_space<vmem>>, vector<8x128xf32>,
    return
  }
  func.func @transform_0(%arg0: i32) -> (i32, i32) {
    %c0_i32 = arith.constant 0 : i32
    %c0_i32_0 = arith.constant 0 : i32
    return %arg0, %c0_i32 : i32, i32
  }
  func.func @transform_1(%arg0: i32) -> (i32, i32) {
    %c0_i32 = arith.constant 0 : i32
    %c0_i32_0 = arith.constant 0 : i32
    return %arg0, %c0_i32 : i32, i32
  }
  func.func @transform_2(%arg0: i32) -> (i32, i32) {
    %c0_i32 = arith.constant 0 : i32
    %c0_i32_0 = arith.constant 0 : i32
    %c0_i32_1 = arith.constant 0 : i32
    return %c0_i32, %c0_i32_0 : i32, i32
  }
  func.func @transform_3(%arg0: i32) -> (i32, i32) {
    %c0_i32 = arith.constant 0 : i32
    %c0_i32_0 = arith.constant 0 : i32
    %c0_i32_1 = arith.constant 0 : i32
    return %c0_i32, %c0_i32_0 : i32, i32
  }
  func.func @transform_4(%arg0: i32) -> (i32, i32) {
    %c0_i32 = arith.constant 0 : i32
    %c0_i32_0 = arith.constant 0 : i32
    %c0_i32_1 = arith.constant 0 : i32
    return %c0_i32, %c0_i32_0 : i32, i32
  }
  func.func @transform_5(%arg0: i32) -> (i32, i32) {
    %c0_i32 = arith.constant 0 : i32
    %c0_i32_0 = arith.constant 0 : i32
    %c0_i32_1 = arith.constant 0 : i32
    return %c0_i32, %c0_i32_0 : i32, i32
  }
  func.func @transform_6(%arg0: i32) -> (i32, i32) {
    %c0_i32 = arith.constant 0 : i32
    %c0_i32_0 = arith.constant 0 : i32
    return %arg0, %c0_i32 : i32, i32
  }
}

</mosaic_0001>

<llo_original>
// kernel: tpu_custom_call.1
$region0: #{tpu_custom_call.1}
  #allocation0 [shape = 'u32[]', space=smem, size = 0x4, offset = 0x4, fixed_abs, tag = 'smem constant byte address 0x4 - core index']
  #allocation1 [shape = 'u32[72,128]{1,0:T(1,128)}', space=vmem, size = 0x9000, scoped, tag = 'internal scratch']
  %s0 = inlined_call_operand.hbm [shape: f32[8,32], index: 0, kind: input, shape index: {}]
  %s1 = inlined_call_operand.hbm [shape: f32[8,48], index: 1, kind: input, shape index: {}]
  %s2 = inlined_call_operand.hbm [shape: f32[32,128], index: 2, kind: input, shape index: {}]
  %s3 = inlined_call_operand.hbm [shape: f32[48,128], index: 3, kind: input, shape index: {}]
  %s4 = inlined_call_operand.vmem [shape: f32[1,128], index: 4, kind: input, shape index: {}]
  %s5 = inlined_call_operand.vmem [shape: f32[1,128], index: 5, kind: input, shape index: {}]
  %s6 = inlined_call_operand.hbm [shape: f32[8,128], index: 6, kind: output, shape index: {}]
  %s7 = sld [smem:[#allocation0]]
  $region50: #{tpu_custom_call.1} parent=0
    _
  %s9 = ssub.s32 1, %s7
  %s10 = scalar_select 0, %s9, %s7
  $region1: #{tpu_custom_call.1} parent=0
    #allocation2 [shape = 'u8[4096]{0}', space=vmem, size = 0x1000, scoped, tag = 'input window, operand 0, single buffered']
    #allocation3 [shape = 's32[1]{0}', space=sflag, size = 0x4, scoped, tag = 'scoped memory for tpu_custom_call.1']
    #allocation4 [shape = 's32[1]{0}', space=sflag, size = 0x4, scoped, tag = 'scoped memory for tpu_custom_call.1']
    #allocation5 [shape = 'u8[4096]{0}', space=vmem, size = 0x1000, scoped, tag = 'input window, operand 1, single buffered']
    #allocation6 [shape = 's32[1]{0}', space=sflag, size = 0x4, scoped, tag = 'scoped memory for tpu_custom_call.1']
    #allocation7 [shape = 'u8[16384]{0}', space=vmem, size = 0x4000, scoped, tag = 'input window, operand 2, single buffered']
    #allocation8 [shape = 'u8[24576]{0}', space=vmem, size = 0x6000, scoped, tag = 'input window, operand 3, single buffered']
    #allocation9 [shape = 's32[1]{0}', space=sflag, size = 0x4, scoped, tag = 'scoped memory for tpu_custom_call.1']
    #allocation10 [shape = 'u8[4096]{0}', space=vmem, size = 0x1000, scoped, tag = 'output window, operand 0, single buffered']
    %11 = vsyncpa [#allocation3], 0
    %12 = vsyncpa [#allocation6], 0
    %13 = vsyncpa [#allocation9], 0
    %14 = vsyncpa [#allocation4], 0
    // Predicated region
    $region2: #{tpu_custom_call.1} parent=1 // pred_check
      _
    $region3: #{tpu_custom_call.1} parent=1 // pred_check_branch
      %16 = sbr.rel (0) target = $region5
    $region4: #{tpu_custom_call.1} parent=1 // pred_region
      %18 = vsyncadd [#allocation3], 0
      %s20 = sshll.u32 %s0, 4
      %s21 = int_to_ptr.hbm [resolvable:$true] %s20
      %s22 = sshll.u32 [#allocation2], 4
      %s23 = int_to_ptr.vmem [resolvable:$true] %s22
      %25 = dma.hbm_to_vmem [thread:$0]  %s21, 128, %s23, [#allocation3]
    $region5: #{tpu_custom_call.1} parent=1 // pred_fallthru
      _
    // Predicated region
    $region6: #{tpu_custom_call.1} parent=1 // pred_check
      _
    $region7: #{tpu_custom_call.1} parent=1 // pred_check_branch
      %27 = sbr.rel (0) target = $region9
    $region8: #{tpu_custom_call.1} parent=1 // pred_region
      %29 = vsyncadd [#allocation6], 0
      %s31 = sshll.u32 %s1, 4
      %s32 = int_to_ptr.hbm [resolvable:$true] %s31
      %s33 = sshll.u32 [#allocation5], 4
      %s34 = int_to_ptr.vmem [resolvable:$true] %s33
      %36 = dma.hbm_to_vmem [thread:$0]  %s32, 128, %s34, [#allocation6]
    $region9: #{tpu_custom_call.1} parent=1 // pred_fallthru
      _
    // Predicated region
    $region10: #{tpu_custom_call.1} parent=1 // pred_check
      _
    $region11: #{tpu_custom_call.1} parent=1 // pred_check_branch
      %38 = sbr.rel (0) target = $region13
    $region12: #{tpu_custom_call.1} parent=1 // pred_region
      %40 = vsyncadd [#allocation6], 0
      %s41 = sshll.u32 %s2, 4
      %s42 = int_to_ptr.hbm [resolvable:$true] %s41
      %s43 = sshll.u32 [#allocation7], 4
      %s44 = int_to_ptr.vmem [resolvable:$true] %s43
      %49 = dma.hbm_to_vmem [thread:$0]  %s42, 512, %s44, [#allocation6], 128, 128, 8
    $region13: #{tpu_custom_call.1} parent=1 // pred_fallthru
      _
    // Predicated region
    $region14: #{tpu_custom_call.1} parent=1 // pred_check
      _
    $region15: #{tpu_custom_call.1} parent=1 // pred_check_branch
      %51 = sbr.rel (0) target = $region17
    $region16: #{tpu_custom_call.1} parent=1 // pred_region
      %53 = vsyncadd [#allocation9], 0
      %s54 = sshll.u32 %s3, 4
      %s55 = int_to_ptr.hbm [resolvable:$true] %s54
      %s56 = sshll.u32 [#allocation8], 4
      %s57 = int_to_ptr.vmem [resolvable:$true] %s56
      %62 = dma.hbm_to_vmem [thread:$0]  %s55, 768, %s57, [#allocation9], 128, 128, 8
    $region17: #{tpu_custom_call.1} parent=1 // pred_fallthru
      _
    // Predicated region
    $region18: #{tpu_custom_call.1} parent=1 // pred_check
      _
    $region19: #{tpu_custom_call.1} parent=1 // pred_check_branch
      %64 = sbr.rel (0) target = $region21
    $region20: #{tpu_custom_call.1} parent=1 // pred_region
      _
    $region21: #{tpu_custom_call.1} parent=1 // pred_fallthru
      _
    // Predicated region
    $region22: #{tpu_custom_call.1} parent=1 // pred_check
      _
    $region23: #{tpu_custom_call.1} parent=1 // pred_check_branch
      %66 = sbr.rel (0) target = $region25
    $region24: #{tpu_custom_call.1} parent=1 // pred_region
      _
    $region25: #{tpu_custom_call.1} parent=1 // pred_fallthru
      _
    // Predicated region
    $region26: #{tpu_custom_call.1} parent=1 // pred_check
      _
    $region27: #{tpu_custom_call.1} parent=1 // pred_check_branch
      %68 = sbr.rel (0) target = $region29
    $region28: #{tpu_custom_call.1} parent=1 // pred_region
      %70 = dma.done [#allocation3], 128
    $region29: #{tpu_custom_call.1} parent=1 // pred_fallthru
      _
    // Predicated region
    $region30: #{tpu_custom_call.1} parent=1 // pred_check
      _
    $region31: #{tpu_custom_call.1} parent=1 // pred_check_branch
      %72 = sbr.rel (0) target = $region33
    $region32: #{tpu_custom_call.1} parent=1 // pred_region
      %74 = dma.done [#allocation6], 128
    $region33: #{tpu_custom_call.1} parent=1 // pred_fallthru
      _
    // Predicated region
    $region34: #{tpu_custom_call.1} parent=1 // pred_check
      _
    $region35: #{tpu_custom_call.1} parent=1 // pred_check_branch
      %76 = sbr.rel (0) target = $region37
    $region36: #{tpu_custom_call.1} parent=1 // pred_region
      %78 = dma.done [#allocation6], 512
    $region37: #{tpu_custom_call.1} parent=1 // pred_fallthru
      _
    // Predicated region
    $region38: #{tpu_custom_call.1} parent=1 // pred_check
      _
    $region39: #{tpu_custom_call.1} parent=1 // pred_check_branch
      %80 = sbr.rel (0) target = $region41
    $region40: #{tpu_custom_call.1} parent=1 // pred_region
      %82 = dma.done [#allocation9], 768
    $region41: #{tpu_custom_call.1} parent=1 // pred_fallthru
      _
    %v83 = vld [vmem:[#allocation2] sm:$0xff]
    %v84 = vld [vmem:[#allocation7] sm:$0xff]
    %v85 = vld [vmem:[#allocation7 + $0x8] sm:$0xff]
    %v86 = vld [vmem:[#allocation7 + $0x10] sm:$0xff]
    %v87 = vld [vmem:[#allocation7 + $0x18] sm:$0xff]
    %v88 = vld [vmem:[%s4] sm:$0x1]
    %v90 = vperm.slane %v88, 0
    %vm92 = vcmask 261120
    %v94 = vsel %vm92, %v83, 0
    %96 = vmatpush.msra.mxu0 0.0
    %97 = vmatpush.msra.mxu0 0.0
    %98 = vmatpush.msra.mxu0 0.0
    %99 = vmatpush.msra.mxu0 0.0
    %100 = vmatpush.msra.mxu0 0.0
    %101 = vmatpush.msra.mxu0 0.0
    %102 = vmatpush.msra.mxu0 0.0
    %103 = vmatpush.msra.mxu0 0.0
    %104 = vmatpush.msra.mxu0 0.0
    %105 = vmatpush.msra.mxu0 0.0
    %106 = vmatpush.msra.mxu0 0.0
    %107 = vmatpush.msra.mxu0 0.0
    %108 = vmatpush.msra.mxu0 %v87
    %109 = vmatpush.msra.mxu0 %v86
    %110 = vmatpush.msra.mxu0 %v85
    %111 = vmatpush.msra.mxu0 %v84
    %112 = vmatmul.f32.gmra.mxu0 %v94
    %v113 = vpop.f32.mrf.mxu0
    %v114 = vadd.f32 %v90, %v113
    %115 = vdwg.mxu0
    %v116 = vld [vmem:[#allocation5] sm:$0xff]
    %v117 = vld [vmem:[#allocation8] sm:$0xff]
    %v118 = vld [vmem:[#allocation8 + $0x8] sm:$0xff]
    %v119 = vld [vmem:[#allocation8 + $0x10] sm:$0xff]
    %v120 = vld [vmem:[#allocation8 + $0x18] sm:$0xff]
    %v121 = vld [vmem:[#allocation8 + $0x20] sm:$0xff]
    %v122 = vld [vmem:[#allocation8 + $0x28] sm:$0xff]
    %v123 = vld [vmem:[%s5] sm:$0x1]
    %v125 = vperm.slane %v123, 0
    %vm127 = vcmask 392192
    %v129 = vsel %vm127, %v116, 0
    %131 = vmatpush.msra.mxu0 0.0
    %132 = vmatpush.msra.mxu0 0.0
    %133 = vmatpush.msra.mxu0 0.0
    %134 = vmatpush.msra.mxu0 0.0
    %135 = vmatpush.msra.mxu0 0.0
    %136 = vmatpush.msra.mxu0 0.0
    %137 = vmatpush.msra.mxu0 0.0
    %138 = vmatpush.msra.mxu0 0.0
    %139 = vmatpush.msra.mxu0 0.0
    %140 = vmatpush.msra.mxu0 0.0
    %141 = vmatpush.msra.mxu0 %v122
    %142 = vmatpush.msra.mxu0 %v121
    %143 = vmatpush.msra.mxu0 %v120
    %144 = vmatpush.msra.mxu0 %v119
    %145 = vmatpush.msra.mxu0 %v118
    %146 = vmatpush.msra.mxu0 %v117
    %147 = vmatmul.f32.gmra.mxu0 %v129
    %v148 = vpop.f32.mrf.mxu0
    %v149 = vadd.f32 %v125, %v148
    %150 = vdwg.mxu0
    %v151 = vadd.f32 %v114, %v149
    %v152 = vsub.f32 %v114, %v149
    %v153 = vmax.f32 %v151, 0.0
    %v154 = vmul.f32 %v152, %v152
    %v155 = vsub.f32 %v153, %v154
    %156 = vst [vmem:[#allocation10] sm:$0xff] %v155
    // Predicated region
    $region42: #{tpu_custom_call.1} parent=1 // pred_check
      _
    $region43: #{tpu_custom_call.1} parent=1 // pred_check_branch
      %158 = sbr.rel (0) target = $region45
    $region44: #{tpu_custom_call.1} parent=1 // pred_region
      %160 = vsyncadd [#allocation4], 0
      %s162 = sshll.u32 [#allocation10], 4
      %s163 = int_to_ptr.vmem [resolvable:$true] %s162
      %s164 = sshll.u32 %s6, 4
      %s165 = int_to_ptr.hbm [resolvable:$true] %s164
      %167 = dma.vmem_to_hbm [thread:$0]  %s163, 128, %s165, [#allocation4]
    $region45: #{tpu_custom_call.1} parent=1 // pred_fallthru
      _
    // Predicated region
    $region46: #{tpu_custom_call.1} parent=1 // pred_check
      _
    $region47: #{tpu_custom_call.1} parent=1 // pred_check_branch
      %169 = sbr.rel (0) target = $region49
    $region48: #{tpu_custom_call.1} parent=1 // pred_region
      %171 = dma.done [#allocation4], 128
    $region49: #{tpu_custom_call.1} parent=1 // pred_fallthru
      _
    %172 = vsyncpa [#allocation3], 1
    %173 = vsyncpa [#allocation6], 1
    %174 = vsyncpa [#allocation9], 1
    %175 = vsyncpa [#allocation4], 1

</llo_original>
